<compile_context>
chip_gen: v7x
topology: tpu7x:2x2x1
jax: 0.10.0
libtpu: 0.0.40
codegen_flags: <defaults>
</compile_context>

<pallas_src>
import functools
import math
from typing import NamedTuple, Optional

import jax
import jax.numpy as jnp
from jax.experimental import pallas as pl
from jax.experimental.pallas import tpu as pltpu

LAYER_NORM_EPS = 1e-12          # config.layer_norm_eps (BERT-style default)
_SQRT_HALF = 1.0 / math.sqrt(2.0)
_GELU_TANH_C = math.sqrt(2.0 / math.pi)


def _round_up(x, m):
    return ((x + m - 1) // m) * m


# ---------------------------------------------------------------------------
# Kernel bodies
# ---------------------------------------------------------------------------

def _gelu_f32(h, approximate):
    if approximate:
        # tanh-approx: transcendental goes to the otherwise-idle EUP slot.
        return 0.5 * h * (1.0 + jnp.tanh(_GELU_TANH_C * (h + 0.044715 * h * h * h)))
    # Exact erf GELU (torch.nn.functional.gelu default / HF ACT2FN["gelu"]).
    return 0.5 * h * (1.0 + jax.lax.erf(h * _SQRT_HALF))


def _bias_gelu_layernorm(h, p_ref, d_true, approximate):
    # h: (tm, Dp) f32 pre-activation; padded columns are exactly 0
    # (zero weight columns, zero bias) so they stay 0 through GELU and the sums.
    h = h + p_ref[0:1, :]
    h = _gelu_f32(h, approximate)
    inv_d = 1.0 / float(d_true)
    # Single-pass variance: two independent XLU reductions, no centered pass.
    s1 = jnp.sum(h, axis=-1, keepdims=True)
    s2 = jnp.sum(h * h, axis=-1, keepdims=True)
    mean = s1 * inv_d
    var = jnp.maximum(s2 * inv_d - mean * mean, 0.0)  # clamp f32 cancellation
    normed = (h - mean) * jax.lax.rsqrt(var + LAYER_NORM_EPS)
    return normed * p_ref[1:2, :] + p_ref[2:3, :]      # padded cols: gamma=beta=0


def _fcl_kernel(x_ref, w_ref, p_ref, o_ref, *, d_true, approximate):
    # Resident-weight path: x (tm, Kp) @ W (Kp, Dp) on the MXU, f32 accumulation.
    h = jnp.dot(x_ref[...], w_ref[...], preferred_element_type=jnp.float32)
    out = _bias_gelu_layernorm(h, p_ref, d_true, approximate)
    # Dropout: inference mode -> identity.
    # TODO(synk): training-mode dropout would need pltpu.prng_seed/prng_random_bits.
    o_ref[...] = out.astype(o_ref.dtype)


def _fcl_kernel_ksplit(x_ref, w_ref, p_ref, o_ref, acc_ref, *, d_true, approximate):
    # Streaming-weight path: accumulate partial products over the K grid axis,
    # run bias+GELU+LayerNorm only on the last K step.
    k = pl.program_id(1)

    @pl.when(k == 0)
    def _():
        acc_ref[...] = jnp.zeros_like(acc_ref)

    acc_ref[...] += jnp.dot(x_ref[...], w_ref[...], preferred_element_type=jnp.float32)

    @pl.when(k == pl.num_programs(1) - 1)
    def _():
        out = _bias_gelu_layernorm(acc_ref[...], p_ref, d_true, approximate)
        o_ref[...] = out.astype(o_ref.dtype)


# ---------------------------------------------------------------------------
# One-time parameter preparation (hoisted out of the per-call path)
# ---------------------------------------------------------------------------

class PreparedFCL(NamedTuple):
    w: jax.Array        # (Kp, Dp) matmul-operand dtype, zero-padded
    params: jax.Array   # (3, Dp) f32: [bias, ln_gamma, ln_beta], zero-padded cols
    input_dim: int
    output_dim: int


def prepare_fcl(w, b, gamma, beta, *, matmul_dtype=jnp.bfloat16):
    """Pad feature dims to 128 lanes, cast the weight to the MXU-operand dtype
    (bf16 default; None keeps the original dtype), fuse bias/gamma/beta into a
    single (3, Dp) f32 slab.  Call once at init; weights are constant."""
    input_dim, output_dim = w.shape
    kp = _round_up(input_dim, 128)
    dp = _round_up(output_dim, 128)
    w_p = w if matmul_dtype is None else w.astype(matmul_dtype)
    if (kp, dp) != (input_dim, output_dim):
        w_p = jnp.pad(w_p, ((0, kp - input_dim), (0, dp - output_dim)))
    params = jnp.zeros((3, dp), jnp.float32)
    params = params.at[0, :output_dim].set(b.astype(jnp.float32))
    params = params.at[1, :output_dim].set(gamma.astype(jnp.float32))
    params = params.at[2, :output_dim].set(beta.astype(jnp.float32))
    return PreparedFCL(w=w_p, params=params,
                       input_dim=input_dim, output_dim=output_dim)


# ---------------------------------------------------------------------------
# Forward pass
# ---------------------------------------------------------------------------

def fully_connected_layer(x, prepared: PreparedFCL, *, tm: Optional[int] = None,
                          tk: Optional[int] = None, approximate_gelu: bool = False,
                          force_k_split: bool = False):
    """x: (batch, seq, input_dim) -> (batch, seq, output_dim)."""
    out_dtype = x.dtype
    batch, seq, input_dim = x.shape
    assert input_dim == prepared.input_dim
    output_dim = prepared.output_dim
    kp, dp = prepared.w.shape
    n_rows = batch * seq

    w_p = prepared.w
    params = prepared.params
    matmul_dtype = w_p.dtype
    x_isz = jnp.dtype(matmul_dtype).itemsize
    w_isz = x_isz
    o_isz = jnp.dtype(out_dtype).itemsize

    # Generation-aware VMEM budget (v5e/v6e: 128 MiB, v7x: 64 MiB per TC).
    try:
        vmem_cap = int(pltpu.get_tpu_info().vmem_capacity_bytes)
    except Exception:
        vmem_cap = 128 << 20
    vmem_budget = int(0.85 * vmem_cap)

    w_resident = kp * dp * w_isz            # Buffered(1): single-buffered weight
    use_k_split = force_k_split or (w_resident > vmem_budget // 2)

    if use_k_split:
        if tk is None:
            tk = 128
            for cand in (512, 384, 256, 128):
                if cand <= kp and kp % cand == 0:
                    tk = cand
                    break
        assert kp % tk == 0
        fixed = 2 * tk * dp * w_isz + 3 * dp * 4 + (2 << 20)
        per_row = 2 * tk * x_isz + 2 * dp * o_isz + dp * 4 + 3 * dp * 4
    else:
        fixed = w_resident + 3 * dp * 4 + (2 << 20)
        per_row = 2 * kp * x_isz + 2 * dp * o_isz + 3 * dp * 4

    # Row tile: as large as the VMEM budget allows (up to 512), multiple of 8.
    rows_padded8 = _round_up(n_rows, 8)
    tm_eff = 512 if tm is None else tm
    tm_eff = max(8, _round_up(min(tm_eff, rows_padded8), 8))
    while tm_eff > 8 and fixed + tm_eff * per_row > vmem_budget:
        tm_eff = max(8, _round_up(tm_eff // 2, 8))
    # v7x has 2 TensorCores: keep at least 2 steps on the "parallel" row axis.
    if rows_padded8 > 8 and -(-n_rows // tm_eff) < 2:
        tm_eff = _round_up(-(-n_rows // 2), 8)
    np_rows = _round_up(n_rows, tm_eff)

    # Aligned fast path: skip the wrapper-side pad (extra HBM pass) entirely.
    x2d = x.reshape(n_rows, input_dim)
    if x2d.dtype != matmul_dtype:
        x2d = x2d.astype(matmul_dtype)
    if (np_rows != n_rows) or (kp != input_dim):
        x2d = jnp.pad(x2d, ((0, np_rows - n_rows), (0, kp - input_dim)))

    need = fixed + tm_eff * per_row
    vmem_limit = int(min(max(need + (4 << 20), 32 << 20), vmem_budget))

    cost = pl.CostEstimate(
        flops=2 * np_rows * kp * dp,
        transcendentals=np_rows * dp,
        bytes_accessed=(np_rows * kp * x_isz + kp * dp * w_isz
                        + 3 * dp * 4 + np_rows * dp * o_isz),
    )

    if not use_k_split:
        kernel = functools.partial(_fcl_kernel, d_true=output_dim,
                                   approximate=approximate_gelu)
        out2d = pl.pallas_call(
            kernel,
            out_shape=jax.ShapeDtypeStruct((np_rows, dp), out_dtype),
            grid_spec=pltpu.PrefetchScalarGridSpec(
                num_scalar_prefetch=0,
                grid=(np_rows // tm_eff,),
                in_specs=[
                    pl.BlockSpec((tm_eff, kp), lambda i: (i, 0)),
                    # Constant index_map -> resident, single-buffered weight/params.
                    pl.BlockSpec((kp, dp), lambda i: (0, 0),
                                 pipeline_mode=pl.Buffered(buffer_count=1)),
                    pl.BlockSpec((3, dp), lambda i: (0, 0),
                                 pipeline_mode=pl.Buffered(buffer_count=1)),
                ],
                out_specs=pl.BlockSpec((tm_eff, dp), lambda i: (i, 0)),
            ),
            compiler_params=pltpu.CompilerParams(
                dimension_semantics=("parallel",),
                vmem_limit_bytes=vmem_limit,
            ),
            cost_estimate=cost,
        )(x2d, w_p, params)
    else:
        kernel = functools.partial(_fcl_kernel_ksplit, d_true=output_dim,
                                   approximate=approximate_gelu)
        out2d = pl.pallas_call(
            kernel,
            out_shape=jax.ShapeDtypeStruct((np_rows, dp), out_dtype),
            grid_spec=pltpu.PrefetchScalarGridSpec(
                num_scalar_prefetch=0,
                grid=(np_rows // tm_eff, kp // tk),
                in_specs=[
                    pl.BlockSpec((tm_eff, tk), lambda i, k: (i, k)),
                    pl.BlockSpec((tk, dp), lambda i, k: (k, 0)),
                    pl.BlockSpec((3, dp), lambda i, k: (0, 0),
                                 pipeline_mode=pl.Buffered(buffer_count=1)),
                ],
                out_specs=pl.BlockSpec((tm_eff, dp), lambda i, k: (i, 0)),
                scratch_shapes=[pltpu.VMEM((tm_eff, dp), jnp.float32)],
            ),
            compiler_params=pltpu.CompilerParams(
                dimension_semantics=("parallel", "arbitrary"),
                vmem_limit_bytes=vmem_limit,
            ),
            cost_estimate=cost,
        )(x2d, w_p, params)

    if (np_rows != n_rows) or (dp != output_dim):
        out2d = out2d[:n_rows, :output_dim]
    return out2d.reshape(batch, seq, output_dim)


# ---------------------------------------------------------------------------
# Pure-JAX reference (torch semantics: Linear -> gelu(exact) -> LayerNorm -> eval Dropout)
# ---------------------------------------------------------------------------

def _reference(x, w, b, gamma, beta):
    h = jnp.einsum("bsd,de->bse", x, w) + b
    h = 0.5 * h * (1.0 + jax.lax.erf(h / jnp.sqrt(2.0)))
    mean = jnp.mean(h, axis=-1, keepdims=True)
    var = jnp.mean((h - mean) ** 2, axis=-1, keepdims=True)
    h = (h - mean) * jax.lax.rsqrt(var + LAYER_NORM_EPS)
    return h * gamma + beta


if __name__ == "__main__":
    # Small shapes consistent with the module's forward: (batch, seq, input_dim).
    batch, seq = 2, 8
    input_dim, output_dim = 32, 64

    key = jax.random.PRNGKey(0)
    kx, kw, kb, kg, kbeta = jax.random.split(key, 5)

    x = jax.random.normal(kx, (batch, seq, input_dim), dtype=jnp.float32)
    bound = 1.0 / math.sqrt(input_dim)
    w = jax.random.uniform(kw, (input_dim, output_dim), jnp.float32, -bound, bound)
    b = jax.random.uniform(kb, (output_dim,), jnp.float32, -bound, bound)
    gamma = jnp.ones((output_dim,), jnp.float32)
    beta = jnp.zeros((output_dim,), jnp.float32)

    ref = _reference(x, w, b, gamma, beta)

    # f32-operand path (exact-numerics check).
    prep_f32 = prepare_fcl(w, b, gamma, beta, matmul_dtype=None)
    out_f32 = fully_connected_layer(x, prep_f32)
    jax.block_until_ready(out_f32)
    assert out_f32.shape == (batch, seq, output_dim)
    assert jnp.allclose(out_f32, ref, atol=5e-4, rtol=5e-4), "f32 path mismatch vs reference"

    # Default bf16 MXU-operand path (f32 accumulation) — the recommended config.
    prep_bf16 = prepare_fcl(w, b, gamma, beta)   # matmul_dtype=bf16 default
    out_bf16 = fully_connected_layer(x, prep_bf16)
    jax.block_until_ready(out_bf16)
    assert out_bf16.shape == (batch, seq, output_dim)
    assert jnp.allclose(out_bf16, ref, atol=1e-1, rtol=1e-1), "bf16 path mismatch vs reference"

    # K-split (streaming-weight) path, forced at small shape so it is exercised.
    in2, out2 = 256, 128
    kx2, kw2, kb2 = jax.random.split(jax.random.PRNGKey(1), 3)
    x2 = jax.random.normal(kx2, (batch, seq, in2), dtype=jnp.float32)
    bound2 = 1.0 / math.sqrt(in2)
    w2 = jax.random.uniform(kw2, (in2, out2), jnp.float32, -bound2, bound2)
    b2 = jax.random.uniform(kb2, (out2,), jnp.float32, -bound2, bound2)
    g2 = jnp.ones((out2,), jnp.float32)
    be2 = jnp.zeros((out2,), jnp.float32)
    ref2 = _reference(x2, w2, b2, g2, be2)
    prep2 = prepare_fcl(w2, b2, g2, be2, matmul_dtype=None)
    out_ks = fully_connected_layer(x2, prep2, force_k_split=True, tk=128)
    jax.block_until_ready(out_ks)
    assert out_ks.shape == (batch, seq, out2)
    assert jnp.allclose(out_ks, ref2, atol=5e-4, rtol=5e-4), "k-split path mismatch vs reference"

    print("KERNEL_OK")
</pallas_src>

<mosaic_0001>
module attributes {stable_mosaic.version = 11 : i64} {
  func.func @_fcl_kernel(%arg0: i32, %arg1: memref<8x128xf32, #tpu.memory_space<vmem>>, %arg2: memref<128x128xf32, #tpu.memory_space<vmem>>, %arg3: memref<3x128xf32, #tpu.memory_space<vmem>>, %arg4: memref<8x128xf32, #tpu.memory_space<vmem>>) attributes {dimension_semantics = [#tpu.dimension_semantics<parallel>], iteration_bounds = array<i64: 2>, scalar_prefetch = 0 : i64, scratch_operands = 0 : i64, tpu.core_type = #tpu.core_type<tc>, window_params = [{transform_indices = @transform_0, window_bounds = array<i64: 8, 128>}, {pipeline_mode = #tpu.pipeline_mode<synchronous>, transform_indices = @transform_1, window_bounds = array<i64: 128, 128>}, {pipeline_mode = #tpu.pipeline_mode<synchronous>, transform_indices = @transform_2, window_bounds = array<i64: 3, 128>}, {transform_indices = @transform_3, window_bounds = array<i64: 8, 128>}]} {
    %c0 = arith.constant 0 : index
    %c0_0 = arith.constant 0 : index
    %0 = vector.load %arg1[%c0, %c0_0] : memref<8x128xf32, #tpu.memory_space<vmem>>, vector<8x128xf32>
    %c0_1 = arith.constant 0 : index
    %c0_2 = arith.constant 0 : index
    %1 = vector.load %arg2[%c0_1, %c0_2] : memref<128x128xf32, #tpu.memory_space<vmem>>, vector<128x128xf32>
    %cst = arith.constant dense<0.000000e+00> : vector<8x128xf32>
    %2 = tpu.matmul %0, %1, %cst {dimension_numbers = #tpu.dot_dimension_numbers<[1], [0], [0], [1], [0, 0, 1, 1], [], []>} : vector<8x128xf32>, vector<128x128xf32>, vector<8x128xf32> -> vector<8x128xf32>
    %c0_3 = arith.constant 0 : index
    %c0_4 = arith.constant 0 : index
    %3 = vector.load %arg3[%c0_3, %c0_4] : memref<3x128xf32, #tpu.memory_space<vmem>>, vector<1x128xf32>
    %4 = vector.broadcast %3 : vector<1x128xf32> to vector<8x128xf32>
    %5 = arith.addf %2, %4 : vector<8x128xf32>
    %cst_5 = arith.constant 5.000000e-01 : f32
    %6 = vector.broadcast %cst_5 : f32 to vector<8x128xf32>
    %7 = arith.mulf %6, %5 : vector<8x128xf32>
    %cst_6 = arith.constant 0.707106769 : f32
    %8 = vector.broadcast %cst_6 : f32 to vector<8x128xf32>
    %9 = arith.mulf %5, %8 : vector<8x128xf32>
    %10 = math.erf %9 : vector<8x128xf32>
    %cst_7 = arith.constant 1.000000e+00 : f32
    %11 = vector.broadcast %cst_7 : f32 to vector<8x128xf32>
    %12 = arith.addf %11, %10 : vector<8x128xf32>
    %13 = arith.mulf %7, %12 : vector<8x128xf32>
    %cst_8 = arith.constant dense<0.000000e+00> : vector<8xf32>
    %14 = vector.multi_reduction <add>, %13, %cst_8 [1] : vector<8x128xf32> to vector<8xf32>
    %15 = vector.shape_cast %14 : vector<8xf32> to vector<8x1xf32>
    %16 = arith.mulf %13, %13 : vector<8x128xf32>
    %cst_9 = arith.constant dense<0.000000e+00> : vector<8xf32>
    %17 = vector.multi_reduction <add>, %16, %cst_9 [1] : vector<8x128xf32> to vector<8xf32>
    %18 = vector.shape_cast %17 : vector<8xf32> to vector<8x1xf32>
    %cst_10 = arith.constant 1.562500e-02 : f32
    %19 = vector.broadcast %cst_10 : f32 to vector<8x1xf32>
    %20 = arith.mulf %15, %19 : vector<8x1xf32>
    %cst_11 = arith.constant 1.562500e-02 : f32
    %21 = vector.broadcast %cst_11 : f32 to vector<8x1xf32>
    %22 = arith.mulf %18, %21 : vector<8x1xf32>
    %23 = arith.mulf %20, %20 : vector<8x1xf32>
    %24 = arith.subf %22, %23 : vector<8x1xf32>
    %cst_12 = arith.constant 0.000000e+00 : f32
    %25 = vector.broadcast %cst_12 : f32 to vector<8x1xf32>
    %26 = arith.maximumf %24, %25 : vector<8x1xf32>
    %27 = vector.broadcast %20 : vector<8x1xf32> to vector<8x128xf32>
    %28 = arith.subf %13, %27 : vector<8x128xf32>
    %cst_13 = arith.constant 9.99999996E-13 : f32
    %29 = vector.broadcast %cst_13 : f32 to vector<8x1xf32>
    %30 = arith.addf %26, %29 : vector<8x1xf32>
    %31 = math.rsqrt %30 : vector<8x1xf32>
    %32 = vector.broadcast %31 : vector<8x1xf32> to vector<8x128xf32>
    %33 = arith.mulf %28, %32 : vector<8x128xf32>
    %c1 = arith.constant 1 : index
    %c0_14 = arith.constant 0 : index
    %34 = vector.load %arg3[%c1, %c0_14] : memref<3x128xf32, #tpu.memory_space<vmem>>, vector<1x128xf32>
    %35 = vector.broadcast %34 : vector<1x128xf32> to vector<8x128xf32>
    %36 = arith.mulf %33, %35 : vector<8x128xf32>
    %c2 = arith.constant 2 : index
    %c0_15 = arith.constant 0 : index
    %37 = vector.load %arg3[%c2, %c0_15] : memref<3x128xf32, #tpu.memory_space<vmem>>, vector<1x128xf32>
    %38 = vector.broadcast %37 : vector<1x128xf32> to vector<8x128xf32>
    %39 = arith.addf %36, %38 : vector<8x128xf32>
    %c0_16 = arith.constant 0 : index
    %c0_17 = arith.constant 0 : index
    %40 = vector.load %arg4[%c0_16, %c0_17] : memref<8x128xf32, #tpu.memory_space<vmem>>, vector<8x128xf32>
    tpu.vector_store %arg4[%c0_16, %c0_17], %39 {strides = array<i32>} : memref<8x128xf32, #tpu.memory_space<vmem>>, vector<8x128xf32>,
    return
  }
  func.func @transform_0(%arg0: i32) -> (i32, i32) {
    %c0_i32 = arith.constant 0 : i32
    %c0_i32_0 = arith.constant 0 : i32
    return %arg0, %c0_i32 : i32, i32
  }
  func.func @transform_1(%arg0: i32) -> (i32, i32) {
    %c0_i32 = arith.constant 0 : i32
    %c0_i32_0 = arith.constant 0 : i32
    %c0_i32_1 = arith.constant 0 : i32
    return %c0_i32, %c0_i32_0 : i32, i32
  }
  func.func @transform_2(%arg0: i32) -> (i32, i32) {
    %c0_i32 = arith.constant 0 : i32
    %c0_i32_0 = arith.constant 0 : i32
    %c0_i32_1 = arith.constant 0 : i32
    return %c0_i32, %c0_i32_0 : i32, i32
  }
  func.func @transform_3(%arg0: i32) -> (i32, i32) {
    %c0_i32 = arith.constant 0 : i32
    %c0_i32_0 = arith.constant 0 : i32
    return %arg0, %c0_i32 : i32, i32
  }
}

</mosaic_0001>

<llo_original>
// kernel: tpu_custom_call.1
$region0: #{tpu_custom_call.1}
  #allocation0 [shape = 'u32[]', space=smem, size = 0x4, offset = 0x4, fixed_abs, tag = 'smem constant byte address 0x4 - core index']
  #allocation1 [shape = 'u32[144,128]{1,0:T(1,128)}', space=vmem, size = 0x12000, scoped, tag = 'internal scratch']
  %s0 = inlined_call_operand.hbm [shape: f32[16,128], index: 0, kind: input, shape index: {}]
  %s1 = inlined_call_operand.hbm [shape: f32[128,128], index: 1, kind: input, shape index: {}]
  %s2 = inlined_call_operand.vmem [shape: f32[3,128], index: 2, kind: input, shape index: {}]
  %s3 = inlined_call_operand.hbm [shape: f32[16,128], index: 3, kind: output, shape index: {}]
  %s4 = sld [smem:[#allocation0]]
  $region53: #{tpu_custom_call.1} parent=0
    _
  %s6 = ssub.s32 1, %s4
  %s7 = scalar_select 0, %s6, %s4
  $region1: #{tpu_custom_call.1} parent=0
    #allocation2 [shape = 'u8[8192]{0}', space=vmem, size = 0x2000, scoped, tag = 'input window, operand 0']
    #allocation3 [shape = 's32[2]{0}', space=sflag, size = 0x8, scoped, tag = 'scoped memory for tpu_custom_call.1']
    #allocation4 [shape = 's32[2]{0}', space=sflag, size = 0x8, scoped, tag = 'scoped memory for tpu_custom_call.1']
    #allocation5 [shape = 'u8[65536]{0}', space=vmem, size = 0x10000, scoped, tag = 'input window, operand 1, single buffered']
    #allocation6 [shape = 's32[1]{0}', space=sflag, size = 0x4, scoped, tag = 'scoped memory for tpu_custom_call.1']
    #allocation7 [shape = 'u8[8192]{0}', space=vmem, size = 0x2000, scoped, tag = 'output window, operand 0']
    %8 = vsyncpa [#allocation3], 0
    %s9 = scalar_lea.sflag [#allocation3], 1
    %10 = vsyncpa %s9, 0
    %11 = vsyncpa [#allocation6], 0
    %12 = vsyncpa [#allocation4], 0
    %s13 = scalar_lea.sflag [#allocation4], 1
    %14 = vsyncpa %s13, 0
    loop: start=0, step=1, limit=4
    $region2: #{tpu_custom_call.1} parent=1 // loop_pre_header
      _
    $region3: #{tpu_custom_call.1} parent=1 // loop_header
      %s16 = sphi 0, %s20
      %p17 = scmp.ge.s32.totalorder %s16, 4
      %s26 = sphi 0, %s28
      %s29 = sphi 0, %s26
      %s30 = sphi 0, %s29
      %s46 = sphi 0, %s30
      %s50 = sphi 0, %s50
      %s52 = sphi 0, %s50
      %s53 = sphi 0, %s52
      %s67 = sphi 0, %s53
      %s71 = sphi 0, %s71
      %s73 = sphi 0, %s71
      %s74 = sphi 0, %s73
      %s88 = sphi 0, %s74
      %s94 = sphi 0, %s96
      %s97 = sphi 0, %s94
      %s98 = sphi 0, %s97
      %s114 = sphi 0, %s98
    $region4: #{tpu_custom_call.1} parent=1 // loop_header_branch
      %19 = sbr.rel (%p17) target = $region8
    $region5: #{tpu_custom_call.1} parent=1 // loop_body
      %s21 = ssub.s32 %s16, 1
      %s22 = ssub.s32 %s16, 2
      %s23 = sadd.s32 %s16, 1
      %s24 = ssub.s32 %s16, %s23
      %p25 = scmp.eq.s32.totalorder %s24, 0
      %s27 = sadd.s32 %s26, 1
      %s28 = scalar_select %p25, %s26, %s27
      %p31 = pneg %p25
      %p32 = scmp.eq.s32.totalorder %s16, 1
      %p33 = por %p31, %p32
      %p34 = scmp.ne.s32.totalorder %s26, %s29
      %p35 = scmp.eq.s32.totalorder %s16, 0
      %p36 = por %p34, %p35
      %p37 = scmp.ne.s32.totalorder %s26, %s29
      %p38 = scmp.eq.s32.totalorder %s21, 1
      %p39 = por %p37, %p38
      %p40 = scmp.ne.s32.totalorder %s29, %s30
      %p41 = scmp.eq.s32.totalorder %s21, 0
      %p42 = por %p40, %p41
      %p43 = scmp.ne.s32.totalorder %s29, %s30
      %p44 = scmp.eq.s32.totalorder %s22, 1
      %p45 = por %p43, %p44
      %p47 = scmp.ne.s32.totalorder %s30, %s46
      %p48 = scmp.eq.s32.totalorder %s22, 0
      %p49 = por %p47, %p48
      %s51 = sadd.s32 %s50, 1
      %p54 = scmp.eq.s32.totalorder %s16, 1
      %p55 = scmp.ne.s32.totalorder %s50, %s52
      %p56 = scmp.eq.s32.totalorder %s16, 0
      %p57 = por %p55, %p56
      %p58 = scmp.ne.s32.totalorder %s50, %s52
      %p59 = scmp.eq.s32.totalorder %s21, 1
      %p60 = por %p58, %p59
      %p61 = scmp.ne.s32.totalorder %s52, %s53
      %p62 = scmp.eq.s32.totalorder %s21, 0
      %p63 = por %p61, %p62
      %p64 = scmp.ne.s32.totalorder %s52, %s53
      %p65 = scmp.eq.s32.totalorder %s22, 1
      %p66 = por %p64, %p65
      %p68 = scmp.ne.s32.totalorder %s53, %s67
      %p69 = scmp.eq.s32.totalorder %s22, 0
      %p70 = por %p68, %p69
      %s72 = sadd.s32 %s71, 1
      %p75 = scmp.eq.s32.totalorder %s16, 1
      %p76 = scmp.ne.s32.totalorder %s71, %s73
      %p77 = scmp.eq.s32.totalorder %s16, 0
      %p78 = por %p76, %p77
      %p79 = scmp.ne.s32.totalorder %s71, %s73
      %p80 = scmp.eq.s32.totalorder %s21, 1
      %p81 = por %p79, %p80
      %p82 = scmp.ne.s32.totalorder %s73, %s74
      %p83 = scmp.eq.s32.totalorder %s21, 0
      %p84 = por %p82, %p83
      %p85 = scmp.ne.s32.totalorder %s73, %s74
      %p86 = scmp.eq.s32.totalorder %s22, 1
      %p87 = por %p85, %p86
      %p89 = scmp.ne.s32.totalorder %s74, %s88
      %p90 = scmp.eq.s32.totalorder %s22, 0
      %p91 = por %p89, %p90
      %s92 = ssub.s32 %s16, %s23
      %p93 = scmp.eq.s32.totalorder %s92, 0
      %s95 = sadd.s32 %s94, 1
      %s96 = scalar_select %p93, %s94, %s95
      %p99 = pneg %p93
      %p100 = scmp.eq.s32.totalorder %s16, 1
      %p101 = por %p99, %p100
      %p102 = scmp.ne.s32.totalorder %s94, %s97
      %p103 = scmp.eq.s32.totalorder %s16, 0
      %p104 = por %p102, %p103
      %p105 = scmp.ne.s32.totalorder %s94, %s97
      %p106 = scmp.eq.s32.totalorder %s21, 1
      %p107 = por %p105, %p106
      %p108 = scmp.ne.s32.totalorder %s97, %s98
      %p109 = scmp.eq.s32.totalorder %s21, 0
      %p110 = por %p108, %p109
      %p111 = scmp.ne.s32.totalorder %s97, %s98
      %p112 = scmp.eq.s32.totalorder %s22, 1
      %p113 = por %p111, %p112
      %p115 = scmp.ne.s32.totalorder %s98, %s114
      %p116 = scmp.eq.s32.totalorder %s22, 0
      %p117 = por %p115, %p116
      %p118 = scmp.le.s32.totalorder 1, %s16
      %p119 = scmp.lt.s32.totalorder %s16, 3
      %p120 = pnand %p118, %p119
      %p121 = pneg %p120
      // Predicated region
      $region9: #{tpu_custom_call.1} parent=5 // pred_check
        _
      $region10: #{tpu_custom_call.1} parent=5 // pred_check_branch
        %123 = sbr.rel (%p120) target = $region12
      $region11: #{tpu_custom_call.1} parent=5 // pred_region
        %s124 = ssub.s32 %s16, 1
        // Predicated region
        $region13: #{tpu_custom_call.1} parent=11 // pred_check
          %p125 = pneg %p63
        $region14: #{tpu_custom_call.1} parent=11 // pred_check_branch
          %127 = sbr.rel (%p125) target = $region16
        $region15: #{tpu_custom_call.1} parent=11 // pred_region
          %s129 = ssub.s32 2048, 2048
          %130 = vsyncadd [#allocation6], %s129
          %s131 = sshll.u32 [#allocation5], 4
          %s132 = int_to_ptr.vmem [resolvable:$true] %s131
          %137 = dma.hbm_to_vmem [thread:$0]  %s1, 2048, %s132, [#allocation6], 128, 128, 8
        $region16: #{tpu_custom_call.1} parent=11 // pred_fallthru
          _
        // Predicated region
        $region17: #{tpu_custom_call.1} parent=11 // pred_check
          %p138 = pneg %p84
        $region18: #{tpu_custom_call.1} parent=11 // pred_check_branch
          %140 = sbr.rel (%p138) target = $region20
        $region19: #{tpu_custom_call.1} parent=11 // pred_region
          _
        $region20: #{tpu_custom_call.1} parent=11 // pred_fallthru
          _
      $region12: #{tpu_custom_call.1} parent=5 // pred_fallthru
        _
      %p141 = scmp.lt.s32.totalorder %s16, 2
      // Predicated region
      $region21: #{tpu_custom_call.1} parent=5 // pred_check
        %p142 = pneg %p141
      $region22: #{tpu_custom_call.1} parent=5 // pred_check_branch
        %144 = sbr.rel (%p142) target = $region24
      $region23: #{tpu_custom_call.1} parent=5 // pred_region
        // Predicated region
        $region25: #{tpu_custom_call.1} parent=23 // pred_check
          %p145 = pneg %p36
        $region26: #{tpu_custom_call.1} parent=23 // pred_check_branch
          %147 = sbr.rel (%p145) target = $region28
        $region27: #{tpu_custom_call.1} parent=23 // pred_region
          %s148 = sand.u32 %s26, 1
          %s149 = scalar_lea.sflag [#allocation3], %s148
          %s150 = sand.u32 %s26, 1
          %s151 = smul.addr %s150, 8
          %s152 = scalar_lea.vmem [#allocation2], %s151
          %s154 = ssub.s32 128, 128
          %155 = vsyncadd %s149, %s154
          %s156 = smul.addr %s16, 128
          %s157 = scalar_lea.hbm %s0, %s156
          %s159 = sshll.u32 %s152, 4
          %s160 = int_to_ptr.vmem [resolvable:$true] %s159
          %162 = dma.hbm_to_vmem [thread:$0]  %s157, 128, %s160, %s149
        $region28: #{tpu_custom_call.1} parent=23 // pred_fallthru
          _
      $region24: #{tpu_custom_call.1} parent=5 // pred_fallthru
        _
      %p163 = scmp.le.s32.totalorder 1, %s16
      %p164 = scmp.lt.s32.totalorder %s16, 3
      %p165 = pnand %p163, %p164
      %p166 = pneg %p165
      // Predicated region
      $region29: #{tpu_custom_call.1} parent=5 // pred_check
        _
      $region30: #{tpu_custom_call.1} parent=5 // pred_check_branch
        %168 = sbr.rel (%p165) target = $region32
      $region31: #{tpu_custom_call.1} parent=5 // pred_region
        %s169 = ssub.s32 %s16, 1
        %s170 = sand.u32 %s29, 1
        %s171 = scalar_lea.sflag [#allocation3], %s170
        %s172 = sand.u32 %s29, 1
        %s173 = smul.addr %s172, 8
        %s174 = scalar_lea.vmem [#allocation2], %s173
        // Predicated region
        $region33: #{tpu_custom_call.1} parent=31 // pred_check
          %p175 = pneg %p42
        $region34: #{tpu_custom_call.1} parent=31 // pred_check_branch
          %177 = sbr.rel (%p175) target = $region36
        $region35: #{tpu_custom_call.1} parent=31 // pred_region
          %178 = dma.done %s171, 128
        $region36: #{tpu_custom_call.1} parent=31 // pred_fallthru
          _
        // Predicated region
        $region37: #{tpu_custom_call.1} parent=31 // pred_check
          %p179 = pneg %p63
        $region38: #{tpu_custom_call.1} parent=31 // pred_check_branch
          %181 = sbr.rel (%p179) target = $region40
        $region39: #{tpu_custom_call.1} parent=31 // pred_region
          %182 = dma.done [#allocation6], 2048
        $region40: #{tpu_custom_call.1} parent=31 // pred_fallthru
          _
        %s183 = sand.u32 %s29, 1
        %s184 = scalar_lea.sflag [#allocation3], %s183
        %s185 = sand.u32 %s29, 1
        %s186 = smul.addr %s185, 8
        %s187 = scalar_lea.vmem [#allocation2], %s186
        %p188 = pneg %p42
        %p189 = pneg %p39
        %p190 = pneg %p63
        %p191 = pneg %p60
        %p192 = pneg %p84
        %p193 = pneg %p81
        %p194 = pneg %p110
        %p195 = pneg %p107
        %s196 = sand.u32 %s97, 1
        %s197 = scalar_lea.sflag [#allocation4], %s196
        %s198 = sand.u32 %s97, 1
        %s199 = smul.addr %s198, 8
        %s200 = scalar_lea.vmem [#allocation7], %s199
        %v201 = vld [vmem:[%s174] sm:$0xff]
        %v202 = vld [vmem:[#allocation5] sm:$0xff]
        %v203 = vld [vmem:[#allocation5 + $0x8] sm:$0xff]
        %v204 = vld [vmem:[#allocation5 + $0x10] sm:$0xff]
        %v205 = vld [vmem:[#allocation5 + $0x18] sm:$0xff]
        %v206 = vld [vmem:[#allocation5 + $0x20] sm:$0xff]
        %v207 = vld [vmem:[#allocation5 + $0x28] sm:$0xff]
        %v208 = vld [vmem:[#allocation5 + $0x30] sm:$0xff]
        %v209 = vld [vmem:[#allocation5 + $0x38] sm:$0xff]
        %v210 = vld [vmem:[#allocation5 + $0x40] sm:$0xff]
        %v211 = vld [vmem:[#allocation5 + $0x48] sm:$0xff]
        %v212 = vld [vmem:[#allocation5 + $0x50] sm:$0xff]
        %v213 = vld [vmem:[#allocation5 + $0x58] sm:$0xff]
        %v214 = vld [vmem:[#allocation5 + $0x60] sm:$0xff]
        %v215 = vld [vmem:[#allocation5 + $0x68] sm:$0xff]
        %v216 = vld [vmem:[#allocation5 + $0x70] sm:$0xff]
        %v217 = vld [vmem:[#allocation5 + $0x78] sm:$0xff]
        %v218 = vld [vmem:[%s2] sm:$0x1]
        %v219 = vlaneseq
        %v220 = vshrl.u32 %v219, 7
        %v221 = vsub.s32 0, %v220
        %v222 = vrot.slane %v218, %v221
        %223 = vmatprep.subr.mxu0 0.0
        %224 = vmatpush1.msra.mxu0 %v202
        %225 = vmatprep.subr.mxu0 0.0
        %226 = vmatpush1.msra.mxu0 %v203
        %227 = vmatprep.subr.mxu0 0.0
        %228 = vmatpush1.msra.mxu0 %v204
        %229 = vmatprep.subr.mxu0 0.0
        %230 = vmatpush1.msra.mxu0 %v205
        %231 = vmatprep.subr.mxu0 0.0
        %232 = vmatpush1.msra.mxu0 %v206
        %233 = vmatprep.subr.mxu0 0.0
        %234 = vmatpush1.msra.mxu0 %v207
        %235 = vmatprep.subr.mxu0 0.0
        %236 = vmatpush1.msra.mxu0 %v208
        %237 = vmatprep.subr.mxu0 0.0
        %238 = vmatpush1.msra.mxu0 %v209
        %239 = vmatprep.subr.mxu0 0.0
        %240 = vmatpush1.msra.mxu0 %v210
        %241 = vmatprep.subr.mxu0 0.0
        %242 = vmatpush1.msra.mxu0 %v211
        %243 = vmatprep.subr.mxu0 0.0
        %244 = vmatpush1.msra.mxu0 %v212
        %245 = vmatprep.subr.mxu0 0.0
        %246 = vmatpush1.msra.mxu0 %v213
        %247 = vmatprep.subr.mxu0 0.0
        %248 = vmatpush1.msra.mxu0 %v214
        %249 = vmatprep.subr.mxu0 0.0
        %250 = vmatpush1.msra.mxu0 %v215
        %251 = vmatprep.subr.mxu0 0.0
        %252 = vmatpush1.msra.mxu0 %v216
        %253 = vmatprep.subr.mxu0 0.0
        %254 = vmatpush1.msra.mxu0 %v217
        %255 = vmatprep.subr.mxu0 0.0
        %256 = vmatpush1.msra.mxu0 0.0
        %257 = vmatprep.subr.mxu0 0.0
        %258 = vmatpush1.msra.mxu0 0.0
        %259 = vmatprep.subr.mxu0 0.0
        %260 = vmatpush1.msra.mxu0 0.0
        %261 = vmatprep.subr.mxu0 0.0
        %262 = vmatpush1.msra.mxu0 0.0
        %263 = vmatprep.subr.mxu0 0.0
        %264 = vmatpush1.msra.mxu0 0.0
        %265 = vmatprep.subr.mxu0 0.0
        %266 = vmatpush1.msra.mxu0 0.0
        %267 = vmatprep.subr.mxu0 0.0
        %268 = vmatpush1.msra.mxu0 0.0
        %269 = vmatprep.subr.mxu0 0.0
        %270 = vmatpush1.msra.mxu0 0.0
        %271 = vmatprep.subr.mxu0 0.0
        %272 = vmatpush1.msra.mxu0 0.0
        %273 = vmatprep.subr.mxu0 0.0
        %274 = vmatpush1.msra.mxu0 0.0
        %275 = vmatprep.subr.mxu0 0.0
        %276 = vmatpush1.msra.mxu0 0.0
        %277 = vmatprep.subr.mxu0 0.0
        %278 = vmatpush1.msra.mxu0 0.0
        %279 = vmatprep.subr.mxu0 0.0
        %280 = vmatpush1.msra.mxu0 0.0
        %281 = vmatprep.subr.mxu0 0.0
        %282 = vmatpush1.msra.mxu0 0.0
        %283 = vmatprep.subr.mxu0 0.0
        %284 = vmatpush1.msra.mxu0 0.0
        %285 = vmatprep.subr.mxu0 0.0
        %286 = vmatpush1.msra.mxu0 0.0
        %287 = vmatprep.mubr.f32.mxu0 0.0
        %288 = vmatmul.mubr.f32.gmra.mrb[0].mxu0 %v201
        %v289 = vpop.f32.mrb[0].mxu0
        %v290 = vadd.f32 %v222, %v289
        %v291 = vpop.f32.mrb[0].mxu0
        %292 = vdwg.mxu0
        %v293 = vmul.f32 %v290, 0.5
        %v294 = vmul.f32 %v290, 0.70710677
        %v295 = verf.f32.pop %v294
        %v296 = vadd.f32 %v295, 1.0
        %v297 = vmul.f32 %v293, %v296
        %298 = vadd.xlane.f32.xlu0 %v297
        %v299 = vpop.xlane.xlu0 %298
        %v300 = vmul.f32 %v297, %v297
        %301 = vadd.xlane.f32.xlu0 %v300
        %v302 = vpop.xlane.xlu0 %301
        %v303 = vmul.f32 %v299, 0.015625
        %v304 = vmul.f32 %v302, 0.015625
        %v305 = vmul.f32 %v303, %v303
        %v306 = vsub.f32 %v304, %v305
        %v307 = vmax.f32 %v306, 0.0
        %v308 = vsub.f32 %v297, %v303
        %v309 = vadd.f32 %v307, 1e-12
        %v310 = vrsqrt.pop %v309
        %v311 = vmul.f32 %v308, %v310
        %v312 = vld [vmem:[%s2 + $0x1] sm:$0x1]
        %v313 = vlaneseq
        %v314 = vshrl.u32 %v313, 7
        %v315 = vsub.s32 0, %v314
        %v316 = vrot.slane %v312, %v315
        %v317 = vmul.f32 %v311, %v316
        %v318 = vld [vmem:[%s2 + $0x2] sm:$0x1]
        %v319 = vlaneseq
        %v320 = vshrl.u32 %v319, 7
        %v321 = vsub.s32 0, %v320
        %v322 = vrot.slane %v318, %v321
        %v323 = vadd.f32 %v317, %v322
        %324 = vst [vmem:[%s200] sm:$0xff] %v323
        %s325 = sand.u32 %s97, 1
        %s326 = scalar_lea.sflag [#allocation4], %s325
        %s327 = sand.u32 %s97, 1
        %s328 = smul.addr %s327, 8
        %s329 = scalar_lea.vmem [#allocation7], %s328
        // Predicated region
        $region41: #{tpu_custom_call.1} parent=31 // pred_check
          %p330 = pneg %p107
        $region42: #{tpu_custom_call.1} parent=31 // pred_check_branch
          %332 = sbr.rel (%p330) target = $region44
        $region43: #{tpu_custom_call.1} parent=31 // pred_region
          %s334 = ssub.s32 128, 128
          %335 = vsyncadd %s326, %s334
          %s336 = smul.addr %s21, 128
          %s337 = scalar_lea.hbm %s3, %s336
          %s339 = sshll.u32 %s329, 4
          %s340 = int_to_ptr.vmem [resolvable:$true] %s339
          %342 = dma.vmem_to_hbm [thread:$0]  %s340, 128, %s337, %s326
        $region44: #{tpu_custom_call.1} parent=31 // pred_fallthru
          _
      $region32: #{tpu_custom_call.1} parent=5 // pred_fallthru
        _
      %p343 = scmp.le.s32.totalorder 2, %s16
      // Predicated region
      $region45: #{tpu_custom_call.1} parent=5 // pred_check
        %p344 = pneg %p343
      $region46: #{tpu_custom_call.1} parent=5 // pred_check_branch
        %346 = sbr.rel (%p344) target = $region48
      $region47: #{tpu_custom_call.1} parent=5 // pred_region
        %s347 = ssub.s32 %s16, 2
        // Predicated region
        $region49: #{tpu_custom_call.1} parent=47 // pred_check
          %p348 = pneg %p113
        $region50: #{tpu_custom_call.1} parent=47 // pred_check_branch
          %350 = sbr.rel (%p348) target = $region52
        $region51: #{tpu_custom_call.1} parent=47 // pred_region
          %s351 = sand.u32 %s98, 1
          %s352 = scalar_lea.sflag [#allocation4], %s351
          %s353 = sand.u32 %s98, 1
          %s354 = smul.addr %s353, 8
          %s355 = scalar_lea.vmem [#allocation7], %s354
          %356 = dma.done %s352, 128
        $region52: #{tpu_custom_call.1} parent=47 // pred_fallthru
          _
      $region48: #{tpu_custom_call.1} parent=5 // pred_fallthru
        _
    $region6: #{tpu_custom_call.1} parent=1 // loop_footer
      %s20 = sadd.s32 1, %s16
    $region7: #{tpu_custom_call.1} parent=1 // loop_footer_branch
      %15 = sbr.rel target = $region3
    $region8: #{tpu_custom_call.1} parent=1 // loop_exit
      _
    %357 = vsyncpa [#allocation3], 1
    %s358 = scalar_lea.sflag [#allocation3], 1
    %359 = vsyncpa %s358, 1
    %360 = vsyncpa [#allocation6], 1
    %361 = vsyncpa [#allocation4], 1
    %s362 = scalar_lea.sflag [#allocation4], 1
    %363 = vsyncpa %s362, 1

</llo_original>
